<compile_context>
chip_gen: v6e
topology: v6e:2x2x1
jax: 0.10.0
libtpu: 0.0.40
codegen_flags: <defaults>
</compile_context>

<pallas_src>
import functools

import jax
import jax.numpy as jnp
from jax.experimental import pallas as pl
from jax.experimental.pallas import tpu as pltpu


# Rows of 128 lanes.  Single-block path used while 2 f32 inputs stay <= ~8 MiB.
_SINGLE_BLOCK_MAX_ROWS = 8192
_DEFAULT_BLOCK_ROWS = 2048  # tiled path: 1 MiB/block/input, x2 buffers x2 inputs = 4 MiB


def _smooth_l1(pred_ref, tgt_ref):
    """Elementwise smooth-L1 with beta=1.0 (PyTorch default), computed in f32."""
    diff = pred_ref[...].astype(jnp.float32) - tgt_ref[...].astype(jnp.float32)
    absd = jnp.abs(diff)
    return jnp.where(absd < 1.0, 0.5 * diff * diff, absd - 0.5)


def _smooth_l1_sum_kernel(pred_ref, tgt_ref, out_ref, *, inv_num_queries):
    """Single-block variant: whole slab in VMEM, scalar result to SMEM."""
    loss = _smooth_l1(pred_ref, tgt_ref)
    rows = loss.shape[0]
    # Split reduction: summing over the leading axis of (rows//8, 8, 128) is
    # pure VPU vreg adds, leaving a single (8,128) partial-sum vreg ...
    partial = loss.reshape(rows // 8, 8, 128).sum(axis=0)
    # ... then exactly one XLU cross-sublane/lane collapse + scale.
    out_ref[0, 0] = jnp.sum(partial) * jnp.float32(inv_num_queries)


def _smooth_l1_sum_tiled_kernel(pred_ref, tgt_ref, out_ref, acc_ref, *,
                                inv_num_queries):
    """Gridded variant: per-step VPU adds into a resident (8,128) accumulator."""
    i = pl.program_id(0)

    @pl.when(i == 0)
    def _():
        acc_ref[...] = jnp.zeros_like(acc_ref)

    loss = _smooth_l1(pred_ref, tgt_ref)
    rows = loss.shape[0]
    acc_ref[...] += loss.reshape(rows // 8, 8, 128).sum(axis=0)

    @pl.when(i == pl.num_programs(0) - 1)
    def _():
        out_ref[0, 0] = jnp.sum(acc_ref[...]) * jnp.float32(inv_num_queries)


def loss_coords_pallas(outputs, targets_stacked, num_queries, *, block_rows=None):
    """Pallas equivalent of SetCriterion.loss_coords.

    outputs, targets_stacked: [B, Q, D] arrays (any float dtype).
    Returns scalar float32 = smooth_l1(outputs, targets).sum() / num_queries.
    block_rows: optional override forcing the gridded path with this row-block.
    """
    assert outputs.shape == targets_stacked.shape
    n = outputs.size
    inv_num_queries = 1.0 / float(num_queries)

    rows_needed = pl.cdiv(n, 128)
    use_tiled = (block_rows is not None) or (rows_needed > _SINGLE_BLOCK_MAX_ROWS)

    if use_tiled:
        br = block_rows if block_rows is not None else _DEFAULT_BLOCK_ROWS
        br = max(8, (br // 8) * 8)          # keep sublane alignment
        pad_multiple = br * 128
    else:
        br = None
        pad_multiple = 8 * 128

    padded = ((n + pad_multiple - 1) // pad_multiple) * pad_multiple

    pred = outputs.reshape(-1)
    tgt = targets_stacked.reshape(-1)
    if padded != n:
        pad = padded - n
        # Identical zero pad on both sides -> padded smooth-L1 contribution is 0.
        pred = jnp.pad(pred, (0, pad))
        tgt = jnp.pad(tgt, (0, pad))

    rows = padded // 128
    pred2d = pred.reshape(rows, 128)
    tgt2d = tgt.reshape(rows, 128)

    if not use_tiled:
        kernel = functools.partial(
            _smooth_l1_sum_kernel, inv_num_queries=inv_num_queries)
        out = pl.pallas_call(
            kernel,
            out_shape=jax.ShapeDtypeStruct((1, 1), jnp.float32),
            in_specs=[
                pl.BlockSpec(memory_space=pltpu.MemorySpace.VMEM),
                pl.BlockSpec(memory_space=pltpu.MemorySpace.VMEM),
            ],
            out_specs=pl.BlockSpec(memory_space=pltpu.MemorySpace.SMEM),
        )(pred2d, tgt2d)
        return out[0, 0]

    # Gridded path: reduction axis only -> "arbitrary"; output / accumulator
    # resident across the whole grid.
    kernel = functools.partial(
        _smooth_l1_sum_tiled_kernel, inv_num_queries=inv_num_queries)
    grid = (rows // br,)
    out = pl.pallas_call(
        kernel,
        out_shape=jax.ShapeDtypeStruct((1, 1), jnp.float32),
        grid=grid,
        in_specs=[
            pl.BlockSpec((br, 128), lambda i: (i, 0)),
            pl.BlockSpec((br, 128), lambda i: (i, 0)),
        ],
        out_specs=pl.BlockSpec(memory_space=pltpu.MemorySpace.SMEM),
        scratch_shapes=[pltpu.VMEM((8, 128), jnp.float32)],
        compiler_params=pltpu.CompilerParams(
            dimension_semantics=("arbitrary",)),
    )(pred2d, tgt2d)
    return out[0, 0]


class SetCriterionPallas:
    """JAX/Pallas re-implementation of the PyTorch SetCriterion forward pass."""

    def __init__(self, num_queries, weight_dict, losses):
        self.num_queries = num_queries
        self.weight_dict = weight_dict
        self.losses = losses

    def loss_coords(self, outputs, targets):
        # targets: list of [Q, D] arrays (one per batch element), stacked like
        # torch.stack(targets) in the reference module.
        targets_stacked = jnp.stack(targets, axis=0)
        val = loss_coords_pallas(outputs, targets_stacked, self.num_queries)
        return {"loss_coords": val}

    def get_loss(self, loss, outputs, targets, **kwargs):
        loss_map = {"coords": self.loss_coords}
        return loss_map[loss](outputs, targets, **kwargs)

    def __call__(self, outputs, targets):
        # TODO(synk): if multiple loss terms are ever added, stack their
        # (pred, target) pairs and reduce them in ONE pallas_call instead of
        # one custom-call per term (dispatch amortization).
        losses = {}
        for loss in self.losses:
            losses.update(self.get_loss(loss, outputs, targets))
        return losses


def _reference_loss(pred, tgt, num_queries):
    d = pred.astype(jnp.float32) - tgt.astype(jnp.float32)
    ad = jnp.abs(d)
    l = jnp.where(ad < 1.0, 0.5 * d * d, ad - 0.5)
    return jnp.sum(l) / num_queries


if __name__ == "__main__":
    key = jax.random.PRNGKey(0)
    batch = 2
    num_queries = 8   # number of predicted keypoints / queries
    coord_dim = 4     # (cx, cy, w, h)-style coordinates as in loss_coords doc

    k1, k2, k3, k4 = jax.random.split(key, 4)
    outputs = jax.random.uniform(k1, (batch, num_queries, coord_dim),
                                 dtype=jnp.float32)
    # list of per-sample target tensors, mimicking `targets` list whose
    # coordinate tensors get torch.stack()-ed in loss_coords.
    targets_all = jax.random.uniform(k2, (batch, num_queries, coord_dim),
                                     dtype=jnp.float32) * 2.0
    targets = [targets_all[i] for i in range(batch)]

    criterion = SetCriterionPallas(
        num_queries=num_queries,
        weight_dict={"loss_coords": 1.0},
        losses=["coords"],
    )

    # Path 1: module-sized inputs -> single-block (no grid) kernel.
    losses = criterion(outputs, targets)
    val = jax.block_until_ready(losses["loss_coords"])
    ref = _reference_loss(outputs, targets_all, num_queries)
    assert jnp.allclose(val, ref, rtol=1e-5, atol=1e-5), (val, ref)

    # Path 2 (robustness check): larger input + explicit block_rows exercises
    # the gridded accumulator path.
    big_pred = jax.random.normal(k3, (4, 512, 64), dtype=jnp.float32)
    big_tgt = jax.random.normal(k4, (4, 512, 64), dtype=jnp.float32)
    val2 = loss_coords_pallas(big_pred, big_tgt, 512, block_rows=256)
    val2 = jax.block_until_ready(val2)
    ref2 = _reference_loss(big_pred, big_tgt, 512)
    assert jnp.allclose(val2, ref2, rtol=1e-5, atol=1e-5), (val2, ref2)

    print("KERNEL_OK")
</pallas_src>

<mosaic_0001>
module attributes {stable_mosaic.version = 11 : i64} {
  func.func @_smooth_l1_sum_kernel(%arg0: memref<8x128xf32, #tpu.memory_space<vmem>>, %arg1: memref<8x128xf32, #tpu.memory_space<vmem>>, %arg2: memref<1x1xf32, #tpu.memory_space<smem>>) attributes {dimension_semantics = [], scalar_prefetch = 0 : i64, scratch_operands = 0 : i64, tpu.core_type = #tpu.core_type<tc>} {
    %c0 = arith.constant 0 : index
    %c0_0 = arith.constant 0 : index
    %0 = vector.load %arg0[%c0, %c0_0] : memref<8x128xf32, #tpu.memory_space<vmem>>, vector<8x128xf32>
    %c0_1 = arith.constant 0 : index
    %c0_2 = arith.constant 0 : index
    %1 = vector.load %arg1[%c0_1, %c0_2] : memref<8x128xf32, #tpu.memory_space<vmem>>, vector<8x128xf32>
    %2 = arith.subf %0, %1 : vector<8x128xf32>
    %3 = math.absf %2 : vector<8x128xf32>
    %cst = arith.constant 1.000000e+00 : f32
    %4 = vector.broadcast %cst : f32 to vector<8x128xf32>
    %5 = arith.cmpf olt, %3, %4 : vector<8x128xf32>
    %cst_3 = arith.constant 5.000000e-01 : f32
    %6 = vector.broadcast %cst_3 : f32 to vector<8x128xf32>
    %7 = arith.mulf %6, %2 : vector<8x128xf32>
    %8 = arith.mulf %7, %2 : vector<8x128xf32>
    %cst_4 = arith.constant 5.000000e-01 : f32
    %9 = vector.broadcast %cst_4 : f32 to vector<8x128xf32>
    %10 = arith.subf %3, %9 : vector<8x128xf32>
    %11 = arith.select %5, %8, %10 : vector<8x128xi1>, vector<8x128xf32>
    %12 = vector.shape_cast %11 : vector<8x128xf32> to vector<1x8x128xf32>
    %cst_5 = arith.constant dense<0.000000e+00> : vector<8x128xf32>
    %13 = vector.multi_reduction <add>, %12, %cst_5 [0] : vector<1x8x128xf32> to vector<8x128xf32>
    %14 = vector.shape_cast %13 : vector<8x128xf32> to vector<1x8x128xf32>
    %cst_6 = arith.constant dense<0.000000e+00> : vector<1xf32>
    %15 = vector.multi_reduction <add>, %14, %cst_6 [1, 2] : vector<1x8x128xf32> to vector<1xf32>
    %16 = vector.shape_cast %15 : vector<1xf32> to vector<1x1x1xf32>
    %17 = vector.extract %16[0, 0, 0] : f32 from vector<1x1x1xf32>
    %cst_7 = arith.constant 1.250000e-01 : f32
    %18 = arith.mulf %17, %cst_7 : f32
    %c0_8 = arith.constant 0 : index
    %c0_9 = arith.constant 0 : index
    %19 = memref.load %arg2[%c0_8, %c0_9] : memref<1x1xf32, #tpu.memory_space<smem>>
    memref.store %18, %arg2[%c0_8, %c0_9] : memref<1x1xf32, #tpu.memory_space<smem>>
    return
  }
}

</mosaic_0001>

<llo_original>
// kernel: tpu_custom_call.1
$region0: #{tpu_custom_call.1}
  #allocation0 [shape = 'u32[]', space=smem, size = 0x4, offset = 0x4, fixed_abs, tag = 'smem constant byte address 0x4 - core index']
  #allocation1 [shape = 'u32[144,128]{1,0:T(1,128)}', space=vmem, size = 0x12000, scoped, tag = 'internal scratch']
  %s0 = inlined_call_operand.hbm [shape: f32[8,128], index: 0, kind: input, shape index: {}]
  %s1 = inlined_call_operand.hbm [shape: f32[8,128], index: 1, kind: input, shape index: {}]
  %s2 = inlined_call_operand.hbm [shape: f32[1,1], index: 2, kind: output, shape index: {}]
  %s3 = sld [smem:[#allocation0]]
  $region26: #{tpu_custom_call.1} parent=0
    _
  %s5 = ssub.s32 1, %s3
  %s6 = scalar_select 0, %s5, %s3
  $region1: #{tpu_custom_call.1} parent=0
    #allocation2 [shape = 'u8[4096]{0}', space=vmem, size = 0x1000, scoped, tag = 'input window, operand 0, single buffered']
    #allocation3 [shape = 's32[1]{0}', space=sflag, size = 0x4, scoped, tag = 'scoped memory for tpu_custom_call.1']
    #allocation4 [shape = 's32[1]{0}', space=sflag, size = 0x4, scoped, tag = 'scoped memory for tpu_custom_call.1']
    #allocation5 [shape = 'u8[4096]{0}', space=vmem, size = 0x1000, scoped, tag = 'input window, operand 1, single buffered']
    #allocation6 [shape = 's32[1]{0}', space=sflag, size = 0x4, scoped, tag = 'scoped memory for tpu_custom_call.1']
    #allocation7 [shape = 'u8[512]{0}', space=smem, size = 0x200, scoped, tag = 'output window, operand 0, single buffered']
    %7 = vsyncpa [#allocation3], 0
    %8 = vsyncpa [#allocation6], 0
    %9 = vsyncpa [#allocation4], 0
    // Predicated region
    $region2: #{tpu_custom_call.1} parent=1 // pred_check
      _
    $region3: #{tpu_custom_call.1} parent=1 // pred_check_branch
      %11 = sbr.rel (0) target = $region5
    $region4: #{tpu_custom_call.1} parent=1 // pred_region
      %s13 = ssub.s32 128, 128
      %14 = vsyncadd [#allocation3], %s13
      %s16 = sshll.u32 [#allocation2], 4
      %s17 = int_to_ptr.vmem [resolvable:$true] %s16
      %19 = dma.hbm_to_vmem [thread:$0]  %s0, 128, %s17, [#allocation3]
    $region5: #{tpu_custom_call.1} parent=1 // pred_fallthru
      _
    // Predicated region
    $region6: #{tpu_custom_call.1} parent=1 // pred_check
      _
    $region7: #{tpu_custom_call.1} parent=1 // pred_check_branch
      %21 = sbr.rel (0) target = $region9
    $region8: #{tpu_custom_call.1} parent=1 // pred_region
      %s23 = ssub.s32 128, 128
      %24 = vsyncadd [#allocation6], %s23
      %s26 = sshll.u32 [#allocation5], 4
      %s27 = int_to_ptr.vmem [resolvable:$true] %s26
      %29 = dma.hbm_to_vmem [thread:$0]  %s1, 128, %s27, [#allocation6]
    $region9: #{tpu_custom_call.1} parent=1 // pred_fallthru
      _
    // Predicated region
    $region10: #{tpu_custom_call.1} parent=1 // pred_check
      _
    $region11: #{tpu_custom_call.1} parent=1 // pred_check_branch
      %31 = sbr.rel (0) target = $region13
    $region12: #{tpu_custom_call.1} parent=1 // pred_region
      %32 = dma.done [#allocation3], 128
    $region13: #{tpu_custom_call.1} parent=1 // pred_fallthru
      _
    // Predicated region
    $region14: #{tpu_custom_call.1} parent=1 // pred_check
      _
    $region15: #{tpu_custom_call.1} parent=1 // pred_check_branch
      %34 = sbr.rel (0) target = $region17
    $region16: #{tpu_custom_call.1} parent=1 // pred_region
      %35 = dma.done [#allocation6], 128
    $region17: #{tpu_custom_call.1} parent=1 // pred_fallthru
      _
    %v36 = vld [vmem:[#allocation2] sm:$0xff]
    %v37 = vld [vmem:[#allocation5] sm:$0xff]
    %v38 = vsub.f32 %v36, %v37
    %v39 = vand.u32 2147483647, %v38
    %vm40 = vcmp.lt.f32.partialorder %v39, 1.0
    %v41 = vmul.f32 %v38, 0.5
    %v42 = vmul.f32 %v41, %v38
    %v43 = vsub.f32 %v39, 0.5
    %v44 = vsel %vm40, %v42, %v43
    %v45 = vadd.f32 %v44, 0.0
    %46 = vadd.xlane.f32.xlu0 %v45
    %v47 = vpop.xlane.xlu0 %46
    %v48 = vrot.slane %v47, 4
    %v49 = vadd.f32 %v47, %v48
    %v50 = vrot.slane %v49, 2
    %v51 = vadd.f32 %v49, %v50
    %v52 = vrot.slane %v51, 1
    %v53 = vadd.f32 %v51, %v52
    %s54 = vtos %v53
    %s55 = smul.f32 %s54, 0.125
    %s56 = scalar_lea.smem [#allocation7], 0
    %57 = sst [smem:[%s56]] %s55
    // Predicated region
    $region18: #{tpu_custom_call.1} parent=1 // pred_check
      _
    $region19: #{tpu_custom_call.1} parent=1 // pred_check_branch
      %59 = sbr.rel (0) target = $region21
    $region20: #{tpu_custom_call.1} parent=1 // pred_region
      %s61 = ssub.s32 16, 16
      %62 = vsyncadd [#allocation4], %s61
      %65 = dma.smem_to_hbm [#allocation7], 16, %s2, [#allocation4]
    $region21: #{tpu_custom_call.1} parent=1 // pred_fallthru
      _
    // Predicated region
    $region22: #{tpu_custom_call.1} parent=1 // pred_check
      _
    $region23: #{tpu_custom_call.1} parent=1 // pred_check_branch
      %67 = sbr.rel (0) target = $region25
    $region24: #{tpu_custom_call.1} parent=1 // pred_region
      %68 = dma.done [#allocation4], 16
    $region25: #{tpu_custom_call.1} parent=1 // pred_fallthru
      _
    %69 = sfence
    %70 = vsyncpa [#allocation3], 1
    %71 = vsyncpa [#allocation6], 1
    %72 = vsyncpa [#allocation4], 1

</llo_original>
